<compile_context>
chip_gen: v7x
topology: tpu7x:2x2x1
jax: 0.10.0
libtpu: 0.0.40
codegen_flags: <defaults>
</compile_context>

<pallas_src>
import functools

import jax
import jax.numpy as jnp
from jax.experimental import pallas as pl
from jax.experimental.pallas import tpu as pltpu

EPS = 1e-5


def _bn_add_kernel(x_ref, res_ref, params_ref, o_ref, *, inv_count, eps):
    # x_ref / res_ref / o_ref: (C, HW) f32
    # params_ref: (2, C) f32, row 0 = gamma, row 1 = beta (lane-major transport)
    x = x_ref[...]

    # Per-channel mean (lane reduce on the XLU).
    mean = jnp.sum(x, axis=1, keepdims=True) * inv_count              # (C, 1)
    centered = x - mean                                               # (C, HW)
    # Biased (training-mode) variance from centered data: no cancellation.
    var = jnp.sum(centered * centered, axis=1, keepdims=True) * inv_count  # (C, 1)
    inv_std = jax.lax.rsqrt(var + eps)                                # EUP slot

    # Single small XLU transpose of the one-vreg param slab: (2, C) -> (C, 2).
    params_t = params_ref[...].T                                      # (C, 2)
    gamma = params_t[:, 0:1]                                          # (C, 1)
    beta = params_t[:, 1:2]                                           # (C, 1)

    scale = gamma * inv_std                                           # (C, 1)
    # y = centered * scale + beta, then residual add (folded into one pass).
    o_ref[...] = centered * scale + (beta + res_ref[...])


def _bn_add_impl(x115, x102, gamma, beta):
    """BatchNorm2d(C) with batch statistics (training-mode forward) + x102.

    x115, x102: (N, C, H, W) float32; gamma, beta: (C,) float32.
    """
    N, C, H, W = x115.shape
    HW = H * W
    count = N * HW

    # Channels -> sublanes, N*H*W -> lanes.  For this module N == 1, so the
    # moveaxis is a degenerate (free) transpose and the reshape is a bitcast —
    # no extra HBM round trips.
    x2d = jnp.moveaxis(x115.astype(jnp.float32), 1, 0).reshape(C, N * HW)
    r2d = jnp.moveaxis(x102.astype(jnp.float32), 1, 0).reshape(C, N * HW)

    # gamma/beta pre-stacked lane-major: one contiguous (2, C) ~640 B DMA into a
    # single vreg instead of two sublane-strided per-channel transfers.
    params = jnp.stack(
        [gamma.astype(jnp.float32), beta.astype(jnp.float32)], axis=0)  # (2, C)

    out2d = pl.pallas_call(
        functools.partial(_bn_add_kernel, inv_count=1.0 / float(count), eps=EPS),
        out_shape=jax.ShapeDtypeStruct((C, N * HW), jnp.float32),
        in_specs=[
            pl.BlockSpec(memory_space=pltpu.MemorySpace.VMEM),
            pl.BlockSpec(memory_space=pltpu.MemorySpace.VMEM),
            pl.BlockSpec(memory_space=pltpu.MemorySpace.VMEM),
        ],
        out_specs=pl.BlockSpec(memory_space=pltpu.MemorySpace.VMEM),
        # Residual has the same shape/dtype as the output: reuse its HBM buffer
        # (the caller donates x102) to skip a separate output allocation.
        input_output_aliases={1: 0},
    )(x2d, r2d, params)

    # Back to NCHW (free for N == 1).
    return jnp.moveaxis(out2d.reshape(C, N, HW), 1, 0).reshape(N, C, H, W)


# Donate the residual so the pallas output can truly alias its HBM buffer.
batchnorm_add = jax.jit(_bn_add_impl, donate_argnums=(1,))


def _reference(x115, x102, gamma, beta):
    mean = jnp.mean(x115, axis=(0, 2, 3), keepdims=True)
    var = jnp.mean((x115 - mean) ** 2, axis=(0, 2, 3), keepdims=True)
    y = (x115 - mean) / jnp.sqrt(var + EPS)
    y = y * gamma.reshape(1, -1, 1, 1) + beta.reshape(1, -1, 1, 1)
    return y + x102


if __name__ == "__main__":
    key = jax.random.PRNGKey(0)
    k1, k2, k3, k4 = jax.random.split(key, 4)

    # Matches the module's inputs: BatchNorm2d(80) on (1, 80, 14, 14).
    N, C, H, W = 1, 80, 14, 14
    x115 = jax.random.normal(k1, (N, C, H, W), dtype=jnp.float32)
    x102 = jax.random.normal(k2, (N, C, H, W), dtype=jnp.float32)
    # PyTorch default init is gamma=1, beta=0; use non-trivial deterministic
    # values to exercise the affine path.
    gamma = 1.0 + 0.1 * jax.random.normal(k3, (C,), dtype=jnp.float32)
    beta = 0.1 * jax.random.normal(k4, (C,), dtype=jnp.float32)

    # Compute the reference first: x102 is donated to the kernel call below.
    ref = jax.block_until_ready(_reference(x115, x102, gamma, beta))

    out = batchnorm_add(x115, x102, gamma, beta)
    out = jax.block_until_ready(out)

    assert out.shape == (N, C, H, W)
    assert jnp.allclose(out, ref, atol=1e-4, rtol=1e-4), "mismatch vs reference"

    print("KERNEL_OK")
</pallas_src>

<mosaic_0001>
module attributes {stable_mosaic.version = 11 : i64} {
  func.func @_bn_add_kernel(%arg0: memref<80x196xf32, #tpu.memory_space<vmem>>, %arg1: memref<80x196xf32, #tpu.memory_space<vmem>>, %arg2: memref<2x80xf32, #tpu.memory_space<vmem>>, %arg3: memref<80x196xf32, #tpu.memory_space<vmem>>) attributes {dimension_semantics = [], scalar_prefetch = 0 : i64, scratch_operands = 0 : i64, tpu.core_type = #tpu.core_type<tc>} {
    %c0 = arith.constant 0 : index
    %c0_0 = arith.constant 0 : index
    %0 = vector.load %arg0[%c0, %c0_0] : memref<80x196xf32, #tpu.memory_space<vmem>>, vector<80x196xf32>
    %cst = arith.constant dense<0.000000e+00> : vector<80xf32>
    %1 = vector.multi_reduction <add>, %0, %cst [1] : vector<80x196xf32> to vector<80xf32>
    %2 = vector.shape_cast %1 : vector<80xf32> to vector<80x1xf32>
    %cst_1 = arith.constant 0.00510204071 : f32
    %3 = vector.broadcast %cst_1 : f32 to vector<80x1xf32>
    %4 = arith.mulf %2, %3 : vector<80x1xf32>
    %5 = vector.broadcast %4 : vector<80x1xf32> to vector<80x196xf32>
    %6 = arith.subf %0, %5 : vector<80x196xf32>
    %7 = arith.mulf %6, %6 : vector<80x196xf32>
    %cst_2 = arith.constant dense<0.000000e+00> : vector<80xf32>
    %8 = vector.multi_reduction <add>, %7, %cst_2 [1] : vector<80x196xf32> to vector<80xf32>
    %9 = vector.shape_cast %8 : vector<80xf32> to vector<80x1xf32>
    %cst_3 = arith.constant 0.00510204071 : f32
    %10 = vector.broadcast %cst_3 : f32 to vector<80x1xf32>
    %11 = arith.mulf %9, %10 : vector<80x1xf32>
    %cst_4 = arith.constant 9.99999974E-6 : f32
    %12 = vector.broadcast %cst_4 : f32 to vector<80x1xf32>
    %13 = arith.addf %11, %12 : vector<80x1xf32>
    %14 = math.rsqrt %13 : vector<80x1xf32>
    %c0_5 = arith.constant 0 : index
    %c0_6 = arith.constant 0 : index
    %15 = vector.load %arg2[%c0_5, %c0_6] : memref<2x80xf32, #tpu.memory_space<vmem>>, vector<2x80xf32>
    %16 = tpu.transpose %15, [1, 0] : vector<2x80xf32> -> vector<80x2xf32>
    %17 = vector.extract_strided_slice %16 {offsets = [0, 0], sizes = [80, 1], strides = [1, 1]} : vector<80x2xf32> to vector<80x1xf32>
    %18 = vector.extract_strided_slice %16 {offsets = [0, 1], sizes = [80, 1], strides = [1, 1]} : vector<80x2xf32> to vector<80x1xf32>
    %19 = arith.mulf %17, %14 : vector<80x1xf32>
    %20 = vector.broadcast %19 : vector<80x1xf32> to vector<80x196xf32>
    %21 = arith.mulf %6, %20 : vector<80x196xf32>
    %c0_7 = arith.constant 0 : index
    %c0_8 = arith.constant 0 : index
    %22 = vector.load %arg1[%c0_7, %c0_8] : memref<80x196xf32, #tpu.memory_space<vmem>>, vector<80x196xf32>
    %23 = vector.broadcast %18 : vector<80x1xf32> to vector<80x196xf32>
    %24 = arith.addf %23, %22 : vector<80x196xf32>
    %25 = arith.addf %21, %24 : vector<80x196xf32>
    %c0_9 = arith.constant 0 : index
    %c0_10 = arith.constant 0 : index
    %26 = vector.load %arg3[%c0_9, %c0_10] : memref<80x196xf32, #tpu.memory_space<vmem>>, vector<80x196xf32>
    tpu.vector_store %arg3[%c0_9, %c0_10], %25 {strides = array<i32>} : memref<80x196xf32, #tpu.memory_space<vmem>>, vector<80x196xf32>,
    return
  }
}

</mosaic_0001>

<llo_original>
// kernel: _bn_add_impl.1
$region0: #{_bn_add_impl.1}
  #allocation0 [shape = 'u32[]', space=smem, size = 0x4, offset = 0x4, fixed_abs, tag = 'smem constant byte address 0x4 - core index']
  #allocation1 [shape = 'u32[144,128]{1,0:T(1,128)}', space=vmem, size = 0x12000, scoped, tag = 'internal scratch']
  %s0 = inlined_call_operand.vmem [shape: f32[80,196], index: 0, kind: input, shape index: {}]
  %s1 = inlined_call_operand.vmem [shape: f32[80,196], index: 1, kind: input, shape index: {}, may-alias: {1,3}]
  %s2 = inlined_call_operand.vmem [shape: f32[2,80], index: 2, kind: input, shape index: {}]
  %s3 = inlined_call_operand.vmem [shape: f32[80,196], index: 3, kind: output, shape index: {}, may-alias: {1,3}]
  %s4 = sld [smem:[#allocation0]]
  $region22: #{_bn_add_impl.1} parent=0
    _
  %s6 = ssub.s32 1, %s4
  %s7 = scalar_select 0, %s6, %s4
  // Predicated region
  $region2: #{_bn_add_impl.1} parent=0 // pred_check
    _
  $region3: #{_bn_add_impl.1} parent=0 // pred_check_branch
    %9 = sbr.rel (0) target = $region5
  $region4: #{_bn_add_impl.1} parent=0 // pred_region
    _
  $region5: #{_bn_add_impl.1} parent=0 // pred_fallthru
    _
  // Predicated region
  $region6: #{_bn_add_impl.1} parent=0 // pred_check
    _
  $region7: #{_bn_add_impl.1} parent=0 // pred_check_branch
    %11 = sbr.rel (0) target = $region9
  $region8: #{_bn_add_impl.1} parent=0 // pred_region
    _
  $region9: #{_bn_add_impl.1} parent=0 // pred_fallthru
    _
  // Predicated region
  $region10: #{_bn_add_impl.1} parent=0 // pred_check
    _
  $region11: #{_bn_add_impl.1} parent=0 // pred_check_branch
    %13 = sbr.rel (0) target = $region13
  $region12: #{_bn_add_impl.1} parent=0 // pred_region
    _
  $region13: #{_bn_add_impl.1} parent=0 // pred_fallthru
    _
  %v14 = vld [vmem:[%s0] sm:$0xff]
  %v15 = vld [vmem:[%s0 + $0x8] sm:$0xff]
  %v16 = vld [vmem:[%s0 + $0x10] sm:$0xff]
  %v17 = vld [vmem:[%s0 + $0x18] sm:$0xff]
  %v18 = vld [vmem:[%s0 + $0x20] sm:$0xff]
  %v19 = vld [vmem:[%s0 + $0x28] sm:$0xff]
  %v20 = vld [vmem:[%s0 + $0x30] sm:$0xff]
  %v21 = vld [vmem:[%s0 + $0x38] sm:$0xff]
  %v22 = vld [vmem:[%s0 + $0x40] sm:$0xff]
  %v23 = vld [vmem:[%s0 + $0x48] sm:$0xff]
  %v24 = vld [vmem:[%s0 + $0x50] sm:$0xff]
  %v25 = vld [vmem:[%s0 + $0x58] sm:$0xff]
  %v26 = vld [vmem:[%s0 + $0x60] sm:$0xff]
  %v27 = vld [vmem:[%s0 + $0x68] sm:$0xff]
  %v28 = vld [vmem:[%s0 + $0x70] sm:$0xff]
  %v29 = vld [vmem:[%s0 + $0x78] sm:$0xff]
  %v30 = vld [vmem:[%s0 + $0x80] sm:$0xff]
  %v31 = vld [vmem:[%s0 + $0x88] sm:$0xff]
  %v32 = vld [vmem:[%s0 + $0x90] sm:$0xff]
  %v33 = vld [vmem:[%s0 + $0x98] sm:$0xff]
  %vm34 = vcmask 556032
  %v35 = vsel %vm34, %v15, 0.0
  %v36 = vadd.f32 %v14, %v35
  %37 = vadd.xlane.f32.xlu0 %v36
  %v38 = vpop.xlane.xlu0 %37
  %v39 = vsel %vm34, %v17, 0.0
  %v40 = vadd.f32 %v16, %v39
  %41 = vadd.xlane.f32.xlu0 %v40
  %v42 = vpop.xlane.xlu0 %41
  %v43 = vsel %vm34, %v19, 0.0
  %v44 = vadd.f32 %v18, %v43
  %45 = vadd.xlane.f32.xlu0 %v44
  %v46 = vpop.xlane.xlu0 %45
  %v47 = vsel %vm34, %v21, 0.0
  %v48 = vadd.f32 %v20, %v47
  %49 = vadd.xlane.f32.xlu0 %v48
  %v50 = vpop.xlane.xlu0 %49
  %v51 = vsel %vm34, %v23, 0.0
  %v52 = vadd.f32 %v22, %v51
  %53 = vadd.xlane.f32.xlu0 %v52
  %v54 = vpop.xlane.xlu0 %53
  %v55 = vsel %vm34, %v25, 0.0
  %v56 = vadd.f32 %v24, %v55
  %57 = vadd.xlane.f32.xlu0 %v56
  %v58 = vpop.xlane.xlu0 %57
  %v59 = vsel %vm34, %v27, 0.0
  %v60 = vadd.f32 %v26, %v59
  %61 = vadd.xlane.f32.xlu0 %v60
  %v62 = vpop.xlane.xlu0 %61
  %v63 = vsel %vm34, %v29, 0.0
  %v64 = vadd.f32 %v28, %v63
  %65 = vadd.xlane.f32.xlu0 %v64
  %v66 = vpop.xlane.xlu0 %65
  %v67 = vsel %vm34, %v31, 0.0
  %v68 = vadd.f32 %v30, %v67
  %69 = vadd.xlane.f32.xlu0 %v68
  %v70 = vpop.xlane.xlu0 %69
  %v71 = vsel %vm34, %v33, 0.0
  %v72 = vadd.f32 %v32, %v71
  %73 = vadd.xlane.f32.xlu0 %v72
  %v74 = vpop.xlane.xlu0 %73
  %v75 = vmul.f32 %v38, 0.0051020407
  %v76 = vmul.f32 %v42, 0.0051020407
  %v77 = vmul.f32 %v46, 0.0051020407
  %v78 = vmul.f32 %v50, 0.0051020407
  %v79 = vmul.f32 %v54, 0.0051020407
  %v80 = vmul.f32 %v58, 0.0051020407
  %v81 = vmul.f32 %v62, 0.0051020407
  %v82 = vmul.f32 %v66, 0.0051020407
  %v83 = vmul.f32 %v70, 0.0051020407
  %v84 = vmul.f32 %v74, 0.0051020407
  %v85 = vsub.f32 %v14, %v75
  %v86 = vsub.f32 %v15, %v75
  %v87 = vsub.f32 %v16, %v76
  %v88 = vsub.f32 %v17, %v76
  %v89 = vsub.f32 %v18, %v77
  %v90 = vsub.f32 %v19, %v77
  %v91 = vsub.f32 %v20, %v78
  %v92 = vsub.f32 %v21, %v78
  %v93 = vsub.f32 %v22, %v79
  %v94 = vsub.f32 %v23, %v79
  %v95 = vsub.f32 %v24, %v80
  %v96 = vsub.f32 %v25, %v80
  %v97 = vsub.f32 %v26, %v81
  %v98 = vsub.f32 %v27, %v81
  %v99 = vsub.f32 %v28, %v82
  %v100 = vsub.f32 %v29, %v82
  %v101 = vsub.f32 %v30, %v83
  %v102 = vsub.f32 %v31, %v83
  %v103 = vsub.f32 %v32, %v84
  %v104 = vsub.f32 %v33, %v84
  %v105 = vmul.f32 %v85, %v85
  %v106 = vmul.f32 %v86, %v86
  %v107 = vmul.f32 %v87, %v87
  %v108 = vmul.f32 %v88, %v88
  %v109 = vmul.f32 %v89, %v89
  %v110 = vmul.f32 %v90, %v90
  %v111 = vmul.f32 %v91, %v91
  %v112 = vmul.f32 %v92, %v92
  %v113 = vmul.f32 %v93, %v93
  %v114 = vmul.f32 %v94, %v94
  %v115 = vmul.f32 %v95, %v95
  %v116 = vmul.f32 %v96, %v96
  %v117 = vmul.f32 %v97, %v97
  %v118 = vmul.f32 %v98, %v98
  %v119 = vmul.f32 %v99, %v99
  %v120 = vmul.f32 %v100, %v100
  %v121 = vmul.f32 %v101, %v101
  %v122 = vmul.f32 %v102, %v102
  %v123 = vmul.f32 %v103, %v103
  %v124 = vmul.f32 %v104, %v104
  %v125 = vsel %vm34, %v106, 0.0
  %v126 = vadd.f32 %v105, %v125
  %127 = vadd.xlane.f32.xlu0 %v126
  %v128 = vpop.xlane.xlu0 %127
  %v129 = vsel %vm34, %v108, 0.0
  %v130 = vadd.f32 %v107, %v129
  %131 = vadd.xlane.f32.xlu0 %v130
  %v132 = vpop.xlane.xlu0 %131
  %v133 = vsel %vm34, %v110, 0.0
  %v134 = vadd.f32 %v109, %v133
  %135 = vadd.xlane.f32.xlu0 %v134
  %v136 = vpop.xlane.xlu0 %135
  %v137 = vsel %vm34, %v112, 0.0
  %v138 = vadd.f32 %v111, %v137
  %139 = vadd.xlane.f32.xlu0 %v138
  %v140 = vpop.xlane.xlu0 %139
  %v141 = vsel %vm34, %v114, 0.0
  %v142 = vadd.f32 %v113, %v141
  %143 = vadd.xlane.f32.xlu0 %v142
  %v144 = vpop.xlane.xlu0 %143
  %v145 = vsel %vm34, %v116, 0.0
  %v146 = vadd.f32 %v115, %v145
  %147 = vadd.xlane.f32.xlu0 %v146
  %v148 = vpop.xlane.xlu0 %147
  %v149 = vsel %vm34, %v118, 0.0
  %v150 = vadd.f32 %v117, %v149
  %151 = vadd.xlane.f32.xlu0 %v150
  %v152 = vpop.xlane.xlu0 %151
  %v153 = vsel %vm34, %v120, 0.0
  %v154 = vadd.f32 %v119, %v153
  %155 = vadd.xlane.f32.xlu0 %v154
  %v156 = vpop.xlane.xlu0 %155
  %v157 = vsel %vm34, %v122, 0.0
  %v158 = vadd.f32 %v121, %v157
  %159 = vadd.xlane.f32.xlu0 %v158
  %v160 = vpop.xlane.xlu0 %159
  %v161 = vsel %vm34, %v124, 0.0
  %v162 = vadd.f32 %v123, %v161
  %163 = vadd.xlane.f32.xlu0 %v162
  %v164 = vpop.xlane.xlu0 %163
  %v165 = vmul.f32 %v128, 0.0051020407
  %v166 = vmul.f32 %v132, 0.0051020407
  %v167 = vmul.f32 %v136, 0.0051020407
  %v168 = vmul.f32 %v140, 0.0051020407
  %v169 = vmul.f32 %v144, 0.0051020407
  %v170 = vmul.f32 %v148, 0.0051020407
  %v171 = vmul.f32 %v152, 0.0051020407
  %v172 = vmul.f32 %v156, 0.0051020407
  %v173 = vmul.f32 %v160, 0.0051020407
  %v174 = vmul.f32 %v164, 0.0051020407
  %v175 = vadd.f32 %v165, 1e-05
  %v176 = vadd.f32 %v166, 1e-05
  %v177 = vadd.f32 %v167, 1e-05
  %v178 = vadd.f32 %v168, 1e-05
  %v179 = vadd.f32 %v169, 1e-05
  %v180 = vadd.f32 %v170, 1e-05
  %v181 = vadd.f32 %v171, 1e-05
  %v182 = vadd.f32 %v172, 1e-05
  %v183 = vadd.f32 %v173, 1e-05
  %v184 = vadd.f32 %v174, 1e-05
  %v185 = vrsqrt.pop %v175
  %v186 = vrsqrt.pop %v176
  %v187 = vrsqrt.pop %v177
  %v188 = vrsqrt.pop %v178
  %v189 = vrsqrt.pop %v179
  %v190 = vrsqrt.pop %v180
  %v191 = vrsqrt.pop %v181
  %v192 = vrsqrt.pop %v182
  %v193 = vrsqrt.pop %v183
  %v194 = vrsqrt.pop %v184
  %v195 = vld [vmem:[%s2] sm:$0x3]
  %196 = vxpose.xlu0.b32.start [1/16] %v195, 128
  %197 = vxpose.xlu0.b32.cont [2/16] 0.0, 128
  %198 = vxpose.xlu0.b32.cont [3/16] 0.0, 128
  %199 = vxpose.xlu0.b32.cont [4/16] 0.0, 128
  %200 = vxpose.xlu0.b32.cont [5/16] 0.0, 128
  %201 = vxpose.xlu0.b32.cont [6/16] 0.0, 128
  %202 = vxpose.xlu0.b32.cont [7/16] 0.0, 128
  %203 = vxpose.xlu0.b32.cont [8/16] 0.0, 128
  %204 = vxpose.xlu0.b32.cont [9/16] 0.0, 128
  %205 = vxpose.xlu0.b32.cont [10/16] 0.0, 128
  %206 = vxpose.xlu0.b32.cont [11/16] 0.0, 128
  %207 = vxpose.xlu0.b32.cont [12/16] 0.0, 128
  %208 = vxpose.xlu0.b32.cont [13/16] 0.0, 128
  %209 = vxpose.xlu0.b32.cont [14/16] 0.0, 128
  %210 = vxpose.xlu0.b32.cont [15/16] 0.0, 128
  %211 = vxpose.xlu0.b32.end [16/16] 0.0, 128
  %v212 = vpop.trf.xlu0
  %v213 = vpop.trf.xlu0
  %v214 = vpop.trf.xlu0
  %v215 = vpop.trf.xlu0
  %v216 = vpop.trf.xlu0
  %v217 = vpop.trf.xlu0
  %v218 = vpop.trf.xlu0
  %v219 = vpop.trf.xlu0
  %v220 = vpop.trf.xlu0
  %v221 = vpop.trf.xlu0
  %v222 = vpop.trf.xlu0
  %v223 = vpop.trf.xlu0
  %v224 = vpop.trf.xlu0
  %v225 = vpop.trf.xlu0
  %v226 = vpop.trf.xlu0
  %v227 = vpop.trf.xlu0
  %v228 = vmul.f32 %v212, %v185
  %v229 = vmul.f32 %v213, %v186
  %v230 = vmul.f32 %v214, %v187
  %v231 = vmul.f32 %v215, %v188
  %v232 = vmul.f32 %v216, %v189
  %v233 = vmul.f32 %v217, %v190
  %v234 = vmul.f32 %v218, %v191
  %v235 = vmul.f32 %v219, %v192
  %v236 = vmul.f32 %v220, %v193
  %v237 = vmul.f32 %v221, %v194
  %239 = vset.pattern.permute.xlu0 0
  %240 = vperm.xlu0 %239, %v228
  %v241 = vpop.permute.xlu0 %240
  %244 = vset.pattern.permute.xlu0 0
  %245 = vperm.xlu0 %244, %v229
  %v246 = vpop.permute.xlu0 %245
  %249 = vset.pattern.permute.xlu0 0
  %250 = vperm.xlu0 %249, %v230
  %v251 = vpop.permute.xlu0 %250
  %254 = vset.pattern.permute.xlu0 0
  %255 = vperm.xlu0 %254, %v231
  %v256 = vpop.permute.xlu0 %255
  %259 = vset.pattern.permute.xlu0 0
  %260 = vperm.xlu0 %259, %v232
  %v261 = vpop.permute.xlu0 %260
  %264 = vset.pattern.permute.xlu0 0
  %265 = vperm.xlu0 %264, %v233
  %v266 = vpop.permute.xlu0 %265
  %269 = vset.pattern.permute.xlu0 0
  %270 = vperm.xlu0 %269, %v234
  %v271 = vpop.permute.xlu0 %270
  %274 = vset.pattern.permute.xlu0 0
  %275 = vperm.xlu0 %274, %v235
  %v276 = vpop.permute.xlu0 %275
  %279 = vset.pattern.permute.xlu0 0
  %280 = vperm.xlu0 %279, %v236
  %v281 = vpop.permute.xlu0 %280
  %284 = vset.pattern.permute.xlu0 0
  %285 = vperm.xlu0 %284, %v237
  %v286 = vpop.permute.xlu0 %285
  %v288 = vmul.f32 %v85, %v241
  %v289 = vmul.f32 %v86, %v241
  %v290 = vmul.f32 %v87, %v246
  %v291 = vmul.f32 %v88, %v246
  %v292 = vmul.f32 %v89, %v251
  %v293 = vmul.f32 %v90, %v251
  %v294 = vmul.f32 %v91, %v256
  %v295 = vmul.f32 %v92, %v256
  %v296 = vmul.f32 %v93, %v261
  %v297 = vmul.f32 %v94, %v261
  %v298 = vmul.f32 %v95, %v266
  %v299 = vmul.f32 %v96, %v266
  %v300 = vmul.f32 %v97, %v271
  %v301 = vmul.f32 %v98, %v271
  %v302 = vmul.f32 %v99, %v276
  %v303 = vmul.f32 %v100, %v276
  %v304 = vmul.f32 %v101, %v281
  %v305 = vmul.f32 %v102, %v281
  %v306 = vmul.f32 %v103, %v286
  %v307 = vmul.f32 %v104, %v286
  %v308 = vld [vmem:[%s1] sm:$0xff]
  %v309 = vld [vmem:[%s1 + $0x8] sm:$0xff]
  %v310 = vld [vmem:[%s1 + $0x10] sm:$0xff]
  %v311 = vld [vmem:[%s1 + $0x18] sm:$0xff]
  %v312 = vld [vmem:[%s1 + $0x20] sm:$0xff]
  %v313 = vld [vmem:[%s1 + $0x28] sm:$0xff]
  %v314 = vld [vmem:[%s1 + $0x30] sm:$0xff]
  %v315 = vld [vmem:[%s1 + $0x38] sm:$0xff]
  %v316 = vld [vmem:[%s1 + $0x40] sm:$0xff]
  %v317 = vld [vmem:[%s1 + $0x48] sm:$0xff]
  %v318 = vld [vmem:[%s1 + $0x50] sm:$0xff]
  %v319 = vld [vmem:[%s1 + $0x58] sm:$0xff]
  %v320 = vld [vmem:[%s1 + $0x60] sm:$0xff]
  %v321 = vld [vmem:[%s1 + $0x68] sm:$0xff]
  %v322 = vld [vmem:[%s1 + $0x70] sm:$0xff]
  %v323 = vld [vmem:[%s1 + $0x78] sm:$0xff]
  %v324 = vld [vmem:[%s1 + $0x80] sm:$0xff]
  %v325 = vld [vmem:[%s1 + $0x88] sm:$0xff]
  %v326 = vld [vmem:[%s1 + $0x90] sm:$0xff]
  %v327 = vld [vmem:[%s1 + $0x98] sm:$0xff]
  %329 = vset.pattern.permute.xlu0 1
  %330 = vperm.xlu0 %329, %v212
  %v331 = vpop.permute.xlu0 %330
  %334 = vset.pattern.permute.xlu0 1
  %335 = vperm.xlu0 %334, %v213
  %v336 = vpop.permute.xlu0 %335
  %339 = vset.pattern.permute.xlu0 1
  %340 = vperm.xlu0 %339, %v214
  %v341 = vpop.permute.xlu0 %340
  %344 = vset.pattern.permute.xlu0 1
  %345 = vperm.xlu0 %344, %v215
  %v346 = vpop.permute.xlu0 %345
  %349 = vset.pattern.permute.xlu0 1
  %350 = vperm.xlu0 %349, %v216
  %v351 = vpop.permute.xlu0 %350
  %354 = vset.pattern.permute.xlu0 1
  %355 = vperm.xlu0 %354, %v217
  %v356 = vpop.permute.xlu0 %355
  %359 = vset.pattern.permute.xlu0 1
  %360 = vperm.xlu0 %359, %v218
  %v361 = vpop.permute.xlu0 %360
  %364 = vset.pattern.permute.xlu0 1
  %365 = vperm.xlu0 %364, %v219
  %v366 = vpop.permute.xlu0 %365
  %369 = vset.pattern.permute.xlu0 1
  %370 = vperm.xlu0 %369, %v220
  %v371 = vpop.permute.xlu0 %370
  %374 = vset.pattern.permute.xlu0 1
  %375 = vperm.xlu0 %374, %v221
  %v376 = vpop.permute.xlu0 %375
  %v378 = vadd.f32 %v331, %v308
  %v379 = vadd.f32 %v331, %v309
  %v380 = vadd.f32 %v336, %v310
  %v381 = vadd.f32 %v336, %v311
  %v382 = vadd.f32 %v341, %v312
  %v383 = vadd.f32 %v341, %v313
  %v384 = vadd.f32 %v346, %v314
  %v385 = vadd.f32 %v346, %v315
  %v386 = vadd.f32 %v351, %v316
  %v387 = vadd.f32 %v351, %v317
  %v388 = vadd.f32 %v356, %v318
  %v389 = vadd.f32 %v356, %v319
  %v390 = vadd.f32 %v361, %v320
  %v391 = vadd.f32 %v361, %v321
  %v392 = vadd.f32 %v366, %v322
  %v393 = vadd.f32 %v366, %v323
  %v394 = vadd.f32 %v371, %v324
  %v395 = vadd.f32 %v371, %v325
  %v396 = vadd.f32 %v376, %v326
  %v397 = vadd.f32 %v376, %v327
  %v398 = vadd.f32 %v288, %v378
  %v399 = vadd.f32 %v289, %v379
  %v400 = vadd.f32 %v290, %v380
  %v401 = vadd.f32 %v291, %v381
  %v402 = vadd.f32 %v292, %v382
  %v403 = vadd.f32 %v293, %v383
  %v404 = vadd.f32 %v294, %v384
  %v405 = vadd.f32 %v295, %v385
  %v406 = vadd.f32 %v296, %v386
  %v407 = vadd.f32 %v297, %v387
  %v408 = vadd.f32 %v298, %v388
  %v409 = vadd.f32 %v299, %v389
  %v410 = vadd.f32 %v300, %v390
  %v411 = vadd.f32 %v301, %v391
  %v412 = vadd.f32 %v302, %v392
  %v413 = vadd.f32 %v303, %v393
  %v414 = vadd.f32 %v304, %v394
  %v415 = vadd.f32 %v305, %v395
  %v416 = vadd.f32 %v306, %v396
  %v417 = vadd.f32 %v307, %v397
  %418 = vst [vmem:[%s3] sm:$0xff] %v398
  %419 = vst.msk [vmem:[%s3 + $0x8] sm:$0xff] %vm34, %v399
  %420 = vst [vmem:[%s3 + $0x10] sm:$0xff] %v400
  %421 = vst.msk [vmem:[%s3 + $0x18] sm:$0xff] %vm34, %v401
  %422 = vst [vmem:[%s3 + $0x20] sm:$0xff] %v402
  %423 = vst.msk [vmem:[%s3 + $0x28] sm:$0xff] %vm34, %v403
  %424 = vst [vmem:[%s3 + $0x30] sm:$0xff] %v404
  %425 = vst.msk [vmem:[%s3 + $0x38] sm:$0xff] %vm34, %v405
  %426 = vst [vmem:[%s3 + $0x40] sm:$0xff] %v406
  %427 = vst.msk [vmem:[%s3 + $0x48] sm:$0xff] %vm34, %v407
  %428 = vst [vmem:[%s3 + $0x50] sm:$0xff] %v408
  %429 = vst.msk [vmem:[%s3 + $0x58] sm:$0xff] %vm34, %v409
  %430 = vst [vmem:[%s3 + $0x60] sm:$0xff] %v410
  %431 = vst.msk [vmem:[%s3 + $0x68] sm:$0xff] %vm34, %v411
  %432 = vst [vmem:[%s3 + $0x70] sm:$0xff] %v412
  %433 = vst.msk [vmem:[%s3 + $0x78] sm:$0xff] %vm34, %v413
  %434 = vst [vmem:[%s3 + $0x80] sm:$0xff] %v414
  %435 = vst.msk [vmem:[%s3 + $0x88] sm:$0xff] %vm34, %v415
  %436 = vst [vmem:[%s3 + $0x90] sm:$0xff] %v416
  %437 = vst.msk [vmem:[%s3 + $0x98] sm:$0xff] %vm34, %v417
  // Predicated region
  $region14: #{_bn_add_impl.1} parent=0 // pred_check
    _
  $region15: #{_bn_add_impl.1} parent=0 // pred_check_branch
    %439 = sbr.rel (0) target = $region17
  $region16: #{_bn_add_impl.1} parent=0 // pred_region
    _
  $region17: #{_bn_add_impl.1} parent=0 // pred_fallthru
    _
  // Predicated region
  $region18: #{_bn_add_impl.1} parent=0 // pred_check
    _
  $region19: #{_bn_add_impl.1} parent=0 // pred_check_branch
    %441 = sbr.rel (0) target = $region21
  $region20: #{_bn_add_impl.1} parent=0 // pred_region
    _
  $region21: #{_bn_add_impl.1} parent=0 // pred_fallthru
    _

</llo_original>
